<compile_context>
chip_gen: v5e
topology: v5e:2x2
jax: 0.10.0
libtpu: 0.0.40
codegen_flags: <defaults>
</compile_context>

<pallas_src>
import functools

import jax
import jax.numpy as jnp
from jax import lax
from jax.experimental import pallas as pl
from jax.experimental.pallas import tpu as pltpu


_SINGLE_BLOCK_BYTES = 2 * 1024 * 1024  # below this total traffic, 1 grid step is fine


def _reference_instance_norm(x, eps=1e-8):
    x = x - jnp.mean(x, axis=(2, 3), keepdims=True)
    return x / jnp.sqrt(jnp.mean(x ** 2, axis=(2, 3), keepdims=True) + eps)


# ---------------------------------------------------------------------------
# Kernels
# ---------------------------------------------------------------------------

def _instance_norm_kernel(x_ref, o_ref, *, eps, hw):
    """Whole-row kernel: each row of the (row_block, HW) tile is one instance."""
    x = x_ref[...].astype(jnp.float32)
    inv_hw = 1.0 / hw
    mean = jnp.sum(x, axis=-1, keepdims=True) * inv_hw
    xc = x - mean
    # Mean of squares of the *centered* values (matches reference semantics).
    var = jnp.sum(xc * xc, axis=-1, keepdims=True) * inv_hw
    o_ref[...] = (xc * lax.rsqrt(var + eps)).astype(o_ref.dtype)


def _instance_norm_packed_kernel(x_ref, o_ref, *, eps, hw, g):
    """Lane-packed kernel for small HW: each row holds g instances of length hw."""
    x = x_ref[...].astype(jnp.float32)          # (row_block, g*hw), g*hw == 128
    lanes = g * hw
    # mt[s, l] == 1 iff lane l belongs to segment (instance) s.  Tiny constant.
    seg = lax.broadcasted_iota(jnp.int32, (g, lanes), 0)
    pos = lax.broadcasted_iota(jnp.int32, (g, lanes), 1) // hw
    mt = (seg == pos).astype(jnp.float32)
    dn = (((1,), (1,)), ((), ()))               # contract lane axes (x @ mt^T)
    hi = lax.Precision.HIGHEST
    inv_hw = 1.0 / hw
    seg_sum = lax.dot_general(x, mt, dn, precision=hi,
                              preferred_element_type=jnp.float32)       # (rb, g)
    mean = jnp.dot(seg_sum, mt, precision=hi,
                   preferred_element_type=jnp.float32) * inv_hw          # (rb, lanes)
    xc = x - mean
    seg_sq = lax.dot_general(xc * xc, mt, dn, precision=hi,
                             preferred_element_type=jnp.float32)
    var = jnp.dot(seg_sq, mt, precision=hi,
                  preferred_element_type=jnp.float32) * inv_hw
    o_ref[...] = (xc * lax.rsqrt(var + eps)).astype(o_ref.dtype)


def _instance_norm_two_pass_kernel(x_ref, o_ref, sum_ref, sq_ref, *, eps, hw):
    """HW-chunked two-pass kernel for rows too large to keep whole in VMEM.

    Grid: (row_blocks, 2, hw_chunks).  Pass 0 accumulates running sum and
    sum-of-squares per row into VMEM scratch; pass 1 normalizes and writes.
    """
    p = pl.program_id(1)
    k = pl.program_id(2)
    x = x_ref[...].astype(jnp.float32)

    @pl.when((p == 0) & (k == 0))
    def _():
        sum_ref[...] = jnp.zeros_like(sum_ref)
        sq_ref[...] = jnp.zeros_like(sq_ref)

    @pl.when(p == 0)
    def _():
        sum_ref[...] += jnp.sum(x, axis=-1, keepdims=True)
        sq_ref[...] += jnp.sum(x * x, axis=-1, keepdims=True)

    @pl.when(p == 1)
    def _():
        inv_hw = 1.0 / hw
        mean = sum_ref[...] * inv_hw
        # Running-sum form E[x^2] - mean^2 (clamped).  Slightly different
        # rounding than the whole-row "mean of centered squares" default.
        var = jnp.maximum(sq_ref[...] * inv_hw - mean * mean, 0.0)
        o_ref[...] = ((x - mean) * lax.rsqrt(var + eps)).astype(o_ref.dtype)


# ---------------------------------------------------------------------------
# Sizing helpers
# ---------------------------------------------------------------------------

def _vmem_capacity_bytes():
    try:
        return int(pltpu.get_tpu_info().vmem_capacity_bytes)
    except Exception:
        return 64 * 1024 * 1024  # conservative (v7x-sized) fallback


def _sublane_multiple(itemsize):
    # Native sublane packing: f32 -> 8, bf16/f16 -> 16, int8/fp8 -> 32.
    return {4: 8, 2: 16, 1: 32}.get(itemsize, 8)


def _largest_divisor_leq(n, cap):
    cap = max(1, min(cap, n))
    for d in range(cap, 0, -1):
        if n % d == 0:
            return d
    return 1


def _pick_row_block(p_rows, lane_padded, itemsize, budget, *, min_grid_steps=4):
    """Rows per block for the whole-row path."""
    sub = _sublane_multiple(itemsize)
    # VMEM cost per block row: double-buffered input + output tiles plus
    # ~2 full-width f32 compute temporaries (upcast x, centered xc).
    per_row_cost = 4 * lane_padded * itemsize + 2 * lane_padded * 4
    cand = max(budget // per_row_cost, sub)

    total_io = 2 * p_rows * lane_padded * itemsize
    if total_io <= _SINGLE_BLOCK_BYTES and cand >= p_rows:
        return p_rows  # tiny problem: per-step overhead would dominate
    # Keep >= min_grid_steps grid steps so DMA-in / compute / DMA-out overlap
    # and v7x can shard the parallel row axis across both TensorCores.
    cand = min(cand, max(pl.cdiv(p_rows, min_grid_steps), 1))
    cand = max((cand // sub) * sub, sub)
    return min(cand, p_rows)


def _pick_two_pass_blocks(hw, itemsize, budget):
    """(row_block, hw_block) for the HW-chunked two-pass path (hw % 128 == 0)."""
    row_block = _sublane_multiple(itemsize)
    n128 = hw // 128
    per_lane_cost = 4 * itemsize + 2 * 4      # double-buffered in/out + f32 temps
    max_c128 = max(budget // (row_block * 128 * per_lane_cost), 1)
    max_c128 = min(max_c128, max(n128 // 2, 1))   # always >= 2 HW chunks
    c128 = _largest_divisor_leq(n128, max_c128)
    return row_block, c128 * 128


# ---------------------------------------------------------------------------
# pallas_call wrappers
# ---------------------------------------------------------------------------

def _call_whole_row(x2d, out_dtype, eps, row_block, g, hw, vmem_limit):
    p_rows, lane = x2d.shape
    itemsize = jnp.dtype(x2d.dtype).itemsize
    if g > 1:
        kernel = functools.partial(_instance_norm_packed_kernel,
                                   eps=float(eps), hw=int(hw), g=int(g))
    else:
        kernel = functools.partial(_instance_norm_kernel,
                                   eps=float(eps), hw=float(hw))
    cost = pl.CostEstimate(flops=5 * p_rows * lane,
                           transcendentals=p_rows * g,
                           bytes_accessed=2 * p_rows * lane * itemsize)
    return pl.pallas_call(
        kernel,
        out_shape=jax.ShapeDtypeStruct((p_rows, lane), out_dtype),
        grid_spec=pltpu.PrefetchScalarGridSpec(
            num_scalar_prefetch=0,
            grid=(pl.cdiv(p_rows, row_block),),
            in_specs=[pl.BlockSpec((row_block, lane), lambda i: (i, 0))],
            out_specs=pl.BlockSpec((row_block, lane), lambda i: (i, 0)),
        ),
        compiler_params=pltpu.CompilerParams(
            dimension_semantics=("parallel",),
            vmem_limit_bytes=int(vmem_limit),
        ),
        cost_estimate=cost,
    )(x2d)


def _call_two_pass(x2d, out_dtype, eps, row_block, hw_block, vmem_limit):
    p_rows, hw = x2d.shape
    itemsize = jnp.dtype(x2d.dtype).itemsize
    grid = (pl.cdiv(p_rows, row_block), 2, hw // hw_block)
    kernel = functools.partial(_instance_norm_two_pass_kernel,
                               eps=float(eps), hw=float(hw))
    cost = pl.CostEstimate(flops=6 * p_rows * hw,
                           transcendentals=p_rows,
                           bytes_accessed=3 * p_rows * hw * itemsize)
    return pl.pallas_call(
        kernel,
        out_shape=jax.ShapeDtypeStruct((p_rows, hw), out_dtype),
        grid_spec=pltpu.PrefetchScalarGridSpec(
            num_scalar_prefetch=0,
            grid=grid,
            in_specs=[pl.BlockSpec((row_block, hw_block), lambda i, p, k: (i, k))],
            # Pass 0 parks the output window on (i, 0) and never writes it, so
            # no garbage is flushed; pass 1 overwrites each chunk in order and
            # the writeback fires on every block-index change as usual.
            out_specs=pl.BlockSpec((row_block, hw_block), lambda i, p, k: (i, p * k)),
            scratch_shapes=[pltpu.VMEM((row_block, 1), jnp.float32),
                            pltpu.VMEM((row_block, 1), jnp.float32)],
        ),
        compiler_params=pltpu.CompilerParams(
            dimension_semantics=("parallel", "arbitrary", "arbitrary"),
            vmem_limit_bytes=int(vmem_limit),
        ),
        cost_estimate=cost,
    )(x2d)


# ---------------------------------------------------------------------------
# Public entry point
# ---------------------------------------------------------------------------

def instance_norm(x, eps=1e-8, *, row_block=None, hw_block=None, force_two_pass=False):
    """Instance norm over [N, C, H, W] input (NCHW); reduction over H, W."""
    if x.ndim != 4:
        raise ValueError(
            f"The input tensor should be with shape [batch_size, channel, "
            f"height, width], but {x.shape} is received!")
    n, c, h, w = x.shape
    rows, hw = n * c, h * w
    itemsize = jnp.dtype(x.dtype).itemsize
    sub = _sublane_multiple(itemsize)

    vmem_cap = _vmem_capacity_bytes()
    # Live-buffer budget (double-buffered in/out blocks + f32 temporaries):
    # ~48 MiB on v5e/v6e (128 MiB VMEM), ~24 MiB on v7x (64 MiB VMEM).
    budget = min(vmem_cap * 3 // 8, 48 * 1024 * 1024)
    vmem_limit = min(vmem_cap * 3 // 4, 96 * 1024 * 1024)

    # --- layout: pack g instances per 128-lane row when HW is lane-sparse ---
    g = 1
    if hw < 128 and 128 % hw == 0 and rows % (128 // hw) == 0:
        g = 128 // hw
    lane = g * hw
    lane_padded = pl.cdiv(lane, 128) * 128
    if lane < 128:
        # Small HW we cannot pack cleanly (e.g. 7x7 with an odd row count):
        # every store would be a masked vst wasting most of the bandwidth.
        # TODO(synk): segmented in-kernel reduction for arbitrary small HW.
        return _reference_instance_norm(x, eps)

    p_rows = rows // g
    x2d = x.reshape(p_rows, lane)  # free reshape: NCHW is row-major contiguous

    per_row_cost = 4 * lane_padded * itemsize + 2 * lane_padded * 4
    fits_whole_row = sub * per_row_cost <= budget
    total_io = 2 * p_rows * lane * itemsize
    two_pass_ok = g == 1 and hw % 128 == 0 and hw // 128 >= 2

    use_two_pass = two_pass_ok and (
        force_two_pass
        or not fits_whole_row
        or (total_io > _SINGLE_BLOCK_BYTES and p_rows < 2 * sub))

    if use_two_pass:
        auto_rb, auto_hb = _pick_two_pass_blocks(hw, itemsize, budget)
        rb = auto_rb if row_block is None else row_block
        hb = auto_hb if hw_block is None else hw_block
        assert hw % hb == 0 and hb % 128 == 0, (hw, hb)
        out2d = _call_two_pass(x2d, x.dtype, eps, min(rb, p_rows), hb, vmem_limit)
        return out2d.reshape(n, c, h, w)

    if not fits_whole_row:
        # Huge rows whose lane count is not a multiple of 128: no clean HW
        # chunking without in-kernel edge masking.
        # TODO(synk): masked HW-chunked reduction for ragged large HW.
        return _reference_instance_norm(x, eps)

    if row_block is None:
        row_block = _pick_row_block(p_rows, lane_padded, itemsize, budget)
    out2d = _call_whole_row(x2d, x.dtype, eps, min(row_block, p_rows), g, hw,
                            vmem_limit)
    return out2d.reshape(n, c, h, w)


if __name__ == "__main__":
    # Primary example: N=2, C=4, 16x16 (lane-dense whole-row path).
    x = jax.random.normal(jax.random.PRNGKey(0), (2, 4, 16, 16), dtype=jnp.float32)
    y = jax.block_until_ready(instance_norm(x, eps=1e-8))
    assert y.shape == x.shape and y.dtype == x.dtype
    assert jnp.allclose(y, _reference_instance_norm(x), atol=1e-5, rtol=1e-5)

    # Multi-block path with a ragged last row block (rows=15, row_block=8).
    x1 = jax.random.normal(jax.random.PRNGKey(1), (3, 5, 16, 8), dtype=jnp.float32)
    y1 = jax.block_until_ready(instance_norm(x1, row_block=8))
    assert jnp.allclose(y1, _reference_instance_norm(x1), atol=1e-5, rtol=1e-5)

    # Lane-packed path for small spatial maps (4x4 -> 8 instances per 128 lanes).
    x2 = jax.random.normal(jax.random.PRNGKey(2), (2, 8, 4, 4), dtype=jnp.float32)
    y2 = jax.block_until_ready(instance_norm(x2))
    assert jnp.allclose(y2, _reference_instance_norm(x2), atol=1e-4, rtol=1e-4)

    # Two-pass HW-chunked path (what very large spatial maps use), forced at a
    # small shape so it stays cheap to test: grid = (1 row block, 2 passes, 2 chunks).
    x3 = jax.random.normal(jax.random.PRNGKey(3), (2, 4, 16, 16), dtype=jnp.float32)
    y3 = jax.block_until_ready(instance_norm(x3, force_two_pass=True))
    assert jnp.allclose(y3, _reference_instance_norm(x3), atol=1e-4, rtol=1e-4)

    print("KERNEL_OK")
</pallas_src>

<mosaic_0001>
module attributes {stable_mosaic.version = 11 : i64} {
  func.func @_instance_norm_kernel(%arg0: i32, %arg1: memref<8x256xf32, #tpu.memory_space<vmem>>, %arg2: memref<8x256xf32, #tpu.memory_space<vmem>>) attributes {dimension_semantics = [#tpu.dimension_semantics<parallel>], iteration_bounds = array<i64: 1>, scalar_prefetch = 0 : i64, scratch_operands = 0 : i64, tpu.core_type = #tpu.core_type<tc>, window_params = [{transform_indices = @transform_0, window_bounds = array<i64: 8, 256>}, {transform_indices = @transform_1, window_bounds = array<i64: 8, 256>}]} {
    %c0 = arith.constant 0 : index
    %c0_0 = arith.constant 0 : index
    %0 = vector.load %arg1[%c0, %c0_0] : memref<8x256xf32, #tpu.memory_space<vmem>>, vector<8x256xf32>
    %cst = arith.constant dense<0.000000e+00> : vector<8xf32>
    %1 = vector.multi_reduction <add>, %0, %cst [1] : vector<8x256xf32> to vector<8xf32>
    %2 = vector.shape_cast %1 : vector<8xf32> to vector<8x1xf32>
    %cst_1 = arith.constant 3.906250e-03 : f32
    %3 = vector.broadcast %cst_1 : f32 to vector<8x1xf32>
    %4 = arith.mulf %2, %3 : vector<8x1xf32>
    %5 = vector.broadcast %4 : vector<8x1xf32> to vector<8x256xf32>
    %6 = arith.subf %0, %5 : vector<8x256xf32>
    %7 = arith.mulf %6, %6 : vector<8x256xf32>
    %cst_2 = arith.constant dense<0.000000e+00> : vector<8xf32>
    %8 = vector.multi_reduction <add>, %7, %cst_2 [1] : vector<8x256xf32> to vector<8xf32>
    %9 = vector.shape_cast %8 : vector<8xf32> to vector<8x1xf32>
    %cst_3 = arith.constant 3.906250e-03 : f32
    %10 = vector.broadcast %cst_3 : f32 to vector<8x1xf32>
    %11 = arith.mulf %9, %10 : vector<8x1xf32>
    %cst_4 = arith.constant 9.99999993E-9 : f32
    %12 = vector.broadcast %cst_4 : f32 to vector<8x1xf32>
    %13 = arith.addf %11, %12 : vector<8x1xf32>
    %14 = math.rsqrt %13 : vector<8x1xf32>
    %15 = vector.broadcast %14 : vector<8x1xf32> to vector<8x256xf32>
    %16 = arith.mulf %6, %15 : vector<8x256xf32>
    %c0_5 = arith.constant 0 : index
    %c0_6 = arith.constant 0 : index
    %17 = vector.load %arg2[%c0_5, %c0_6] : memref<8x256xf32, #tpu.memory_space<vmem>>, vector<8x256xf32>
    tpu.vector_store %arg2[%c0_5, %c0_6], %16 {strides = array<i32>} : memref<8x256xf32, #tpu.memory_space<vmem>>, vector<8x256xf32>,
    return
  }
  func.func @transform_0(%arg0: i32) -> (i32, i32) {
    %c0_i32 = arith.constant 0 : i32
    %c0_i32_0 = arith.constant 0 : i32
    return %arg0, %c0_i32 : i32, i32
  }
  func.func @transform_1(%arg0: i32) -> (i32, i32) {
    %c0_i32 = arith.constant 0 : i32
    %c0_i32_0 = arith.constant 0 : i32
    return %arg0, %c0_i32 : i32, i32
  }
}

</mosaic_0001>

<llo_original>
// kernel: tpu_custom_call.1
$region0: #{tpu_custom_call.1}
  #allocation0 [shape = 'u32[]', space=smem, size = 0x4, offset = 0x4, fixed_abs, tag = 'smem constant byte address 0x4 - core index']
  #allocation1 [shape = 'u32[72,128]{1,0:T(1,128)}', space=vmem, size = 0x9000, scoped, tag = 'internal scratch']
  %s0 = inlined_call_operand.hbm [shape: f32[8,256], index: 0, kind: input, shape index: {}]
  %s1 = inlined_call_operand.hbm [shape: f32[8,256], index: 1, kind: output, shape index: {}]
  %s2 = sld [smem:[#allocation0]]
  $region18: #{tpu_custom_call.1} parent=0
    _
  %s4 = ssub.s32 1, %s2
  %s5 = scalar_select 0, %s4, %s2
  $region1: #{tpu_custom_call.1} parent=0
    #allocation2 [shape = 'u8[8192]{0}', space=vmem, size = 0x2000, scoped, tag = 'input window, operand 0, single buffered']
    #allocation3 [shape = 's32[1]{0}', space=sflag, size = 0x4, scoped, tag = 'scoped memory for tpu_custom_call.1']
    #allocation4 [shape = 's32[1]{0}', space=sflag, size = 0x4, scoped, tag = 'scoped memory for tpu_custom_call.1']
    #allocation5 [shape = 'u8[8192]{0}', space=vmem, size = 0x2000, scoped, tag = 'output window, operand 0, single buffered']
    %6 = vsyncpa [#allocation3], 0
    %7 = vsyncpa [#allocation4], 0
    // Predicated region
    $region2: #{tpu_custom_call.1} parent=1 // pred_check
      _
    $region3: #{tpu_custom_call.1} parent=1 // pred_check_branch
      %9 = sbr.rel (0) target = $region5
    $region4: #{tpu_custom_call.1} parent=1 // pred_region
      %11 = vsyncadd [#allocation3], 0
      %s13 = sshll.u32 %s0, 4
      %s14 = int_to_ptr.hbm [resolvable:$true] %s13
      %s15 = sshll.u32 [#allocation2], 4
      %s16 = int_to_ptr.vmem [resolvable:$true] %s15
      %18 = dma.hbm_to_vmem [thread:$0]  %s14, 256, %s16, [#allocation3]
    $region5: #{tpu_custom_call.1} parent=1 // pred_fallthru
      _
    // Predicated region
    $region6: #{tpu_custom_call.1} parent=1 // pred_check
      _
    $region7: #{tpu_custom_call.1} parent=1 // pred_check_branch
      %20 = sbr.rel (0) target = $region9
    $region8: #{tpu_custom_call.1} parent=1 // pred_region
      %22 = dma.done [#allocation3], 256
    $region9: #{tpu_custom_call.1} parent=1 // pred_fallthru
      _
    %v23 = vld [vmem:[#allocation2] sm:$0xff]
    %v24 = vld [vmem:[#allocation2 + $0x8] sm:$0xff]
    %v25 = vadd.f32 %v23, %v24
    %26 = vadd.xlane.f32.xlu0 %v25
    %v27 = vpop.xlane.xlu0 %26
    %v28 = vmul.f32 %v27, 0.00390625
    %v29 = vsub.f32 %v23, %v28
    %v30 = vsub.f32 %v24, %v28
    %v31 = vmul.f32 %v29, %v29
    %v32 = vmul.f32 %v30, %v30
    %v33 = vadd.f32 %v31, %v32
    %34 = vadd.xlane.f32.xlu0 %v33
    %v35 = vpop.xlane.xlu0 %34
    %v36 = vmul.f32 %v35, 0.00390625
    %v37 = vadd.f32 %v36, 1e-08
    %v38 = vrsqrt.pop %v37
    %v39 = vmul.f32 %v38, %v37
    %v40 = vmul.f32 %v39, %v38
    %v41 = vmul.f32 0.5, %v40
    %v42 = vsub.f32 1.5, %v41
    %v43 = vmul.f32 %v38, %v42
    %vm44 = vweird.f32 %v37
    %vm45 = vweird.f32 %v38
    %vm46 = vmor %vm44, %vm45
    %v47 = vsel %vm46, %v38, %v43
    %v48 = vmul.f32 %v29, %v47
    %v49 = vmul.f32 %v30, %v47
    %50 = vst [vmem:[#allocation5] sm:$0xff] %v48
    %51 = vst [vmem:[#allocation5 + $0x8] sm:$0xff] %v49
    // Predicated region
    $region10: #{tpu_custom_call.1} parent=1 // pred_check
      _
    $region11: #{tpu_custom_call.1} parent=1 // pred_check_branch
      %53 = sbr.rel (0) target = $region13
    $region12: #{tpu_custom_call.1} parent=1 // pred_region
      %55 = vsyncadd [#allocation4], 0
      %s57 = sshll.u32 [#allocation5], 4
      %s58 = int_to_ptr.vmem [resolvable:$true] %s57
      %s59 = sshll.u32 %s1, 4
      %s60 = int_to_ptr.hbm [resolvable:$true] %s59
      %62 = dma.vmem_to_hbm [thread:$0]  %s58, 256, %s60, [#allocation4]
    $region13: #{tpu_custom_call.1} parent=1 // pred_fallthru
      _
    // Predicated region
    $region14: #{tpu_custom_call.1} parent=1 // pred_check
      _
    $region15: #{tpu_custom_call.1} parent=1 // pred_check_branch
      %64 = sbr.rel (0) target = $region17
    $region16: #{tpu_custom_call.1} parent=1 // pred_region
      %66 = dma.done [#allocation4], 256
    $region17: #{tpu_custom_call.1} parent=1 // pred_fallthru
      _
    %67 = vsyncpa [#allocation3], 1
    %68 = vsyncpa [#allocation4], 1

</llo_original>
